<compile_context>
chip_gen: v5e
topology: v5e:2x2
jax: 0.10.0
libtpu: 0.0.40
codegen_flags: <defaults>
</compile_context>

<pallas_src>
import jax
import jax.numpy as jnp
from jax.experimental import pallas as pl
from jax.experimental.pallas import tpu as pltpu

C_IN = 13
C_OUT = 13
TILE_L_MAX = 32768      # lane-tile cap (multiple of 128); ~8 MiB dbl-buffered VMEM
MAX_BL_ELEMS = 32768    # Bblk * tile_l cap for the batch-folded path
SMALL_L = 512           # below this, fold batches into the block


def _cdiv(a, b):
    return (a + b - 1) // b


def _round_up(x, m):
    return _cdiv(x, m) * m


def _kernel_2d(w_ref, b_ref, x_ref, o_ref):
    # w_ref: (C_OUT, C_IN)   b_ref: (C_OUT, 1)
    # x_ref: (C_IN, TL)      o_ref: (C_OUT, TL)   (batch dim squeezed)
    y = jnp.dot(w_ref[...], x_ref[...], preferred_element_type=jnp.float32)
    o_ref[...] = jax.nn.sigmoid(y + b_ref[...]).astype(o_ref.dtype)


def _kernel_folded(wt_ref, b_ref, x_ref, o_ref):
    # wt_ref: (C_IN, C_OUT, 1) with wt[c, o, 0] == W[o, c]
    # b_ref : (C_OUT, 1)
    # x_ref : (Bblk, C_IN, TL)   o_ref: (Bblk, C_OUT, TL)
    # 13 broadcasted multiply-adds on the VPU (columns/batches independent, so
    # masked edge blocks stay correct).
    acc = wt_ref[0] * x_ref[:, 0:1, :]
    for c in range(1, C_IN):
        acc = acc + wt_ref[c] * x_ref[:, c:c + 1, :]
    o_ref[...] = jax.nn.sigmoid(acc + b_ref[...]).astype(o_ref.dtype)


def discriminator_forward(x_ncl, weight, bias, *, tile_l_max=TILE_L_MAX):
    """x_ncl: (B, 13, L) float32; weight: (13, 13) [out, in]; bias: (13,)."""
    B, C, L = x_ncl.shape
    assert C == C_IN

    # ---- L tiling: lane-dense, no host-side padding (Pallas masks the edge) ----
    if L <= tile_l_max:
        tile_l, n_l = L, 1                     # full dim -> always layout-legal
        # Small-L regime: fold batches into the block to amortize step overhead.
        bblk = max(1, min(B, MAX_BL_ELEMS // max(L, 1))) if L < SMALL_L else 1
    else:
        n_l = _cdiv(L, tile_l_max)
        tile_l = _round_up(_cdiv(L, n_l), 128)  # balanced tiles -> minimal edge waste
        n_l = _cdiv(L, tile_l)
        bblk = 1

    n_b = _cdiv(B, bblk)
    # Keep at least 2 grid steps when possible (v7x megacore + pipelining overlap).
    if n_b * n_l < 2 and B > 1:
        bblk = _cdiv(B, 2)
        n_b = _cdiv(B, bblk)

    grid = (n_b, n_l)

    cost = pl.CostEstimate(
        flops=2 * B * C_OUT * C_IN * L,
        transcendentals=B * C_OUT * L,
        bytes_accessed=4 * B * L * (C_IN + C_OUT) + 4 * (C_OUT * C_IN + C_OUT),
    )

    b2d = bias.reshape(C_OUT, 1)

    if bblk == 1:
        kernel = _kernel_2d
        w_arg = weight                                      # (C_OUT, C_IN)
        w_spec = pl.BlockSpec((C_OUT, C_IN), lambda b, l: (0, 0))
        x_spec = pl.BlockSpec((pl.Squeezed(), C_IN, tile_l), lambda b, l: (b, 0, l))
        o_spec = pl.BlockSpec((pl.Squeezed(), C_OUT, tile_l), lambda b, l: (b, 0, l))
    else:
        kernel = _kernel_folded
        w_arg = weight.T.reshape(C_IN, C_OUT, 1)            # wt[c, o, 0] = W[o, c]
        w_spec = pl.BlockSpec((C_IN, C_OUT, 1), lambda b, l: (0, 0, 0))
        x_spec = pl.BlockSpec((bblk, C_IN, tile_l), lambda b, l: (b, 0, l))
        o_spec = pl.BlockSpec((bblk, C_OUT, tile_l), lambda b, l: (b, 0, l))

    return pl.pallas_call(
        kernel,
        out_shape=jax.ShapeDtypeStruct((B, C_OUT, L), x_ncl.dtype),
        grid_spec=pltpu.PrefetchScalarGridSpec(
            num_scalar_prefetch=0,
            grid=grid,
            in_specs=[
                w_spec,
                pl.BlockSpec((C_OUT, 1), lambda b, l: (0, 0)),
                x_spec,
            ],
            out_specs=o_spec,
        ),
        compiler_params=pltpu.CompilerParams(
            dimension_semantics=("parallel", "parallel")),
        cost_estimate=cost,
    )(w_arg, b2d, x_ncl)


if __name__ == "__main__":
    key = jax.random.PRNGKey(0)
    kx1, kx2, kx3, kw, kb = jax.random.split(key, 5)

    # Deterministic parameter init (mimics PyTorch's uniform fan-in bound).
    bound = 1.0 / jnp.sqrt(float(C_IN))
    weight = jax.random.uniform(kw, (C_OUT, C_IN), jnp.float32, -bound, bound)
    bias = jax.random.uniform(kb, (C_OUT,), jnp.float32, -bound, bound)

    def reference(x):
        y = jnp.einsum("oc,bcl->bol", weight, x,
                       precision=jax.lax.Precision.HIGHEST)
        return jax.nn.sigmoid(y + bias[None, :, None])

    # Case 1: tiny (B=2, L=16) -> per-batch squeezed 2-D path, 2 grid steps.
    x1 = jax.random.normal(kx1, (2, C_IN, 16), dtype=jnp.float32)
    o1 = discriminator_forward(x1, weight, bias)
    jax.block_until_ready(o1)
    assert o1.shape == x1.shape
    assert jnp.allclose(o1, reference(x1), atol=1e-5, rtol=1e-5)

    # Case 2: small-L / larger-B -> batch-folded path (incl. a masked edge
    # batch block: B=5, Bblk=3).
    x2 = jax.random.normal(kx2, (5, C_IN, 16), dtype=jnp.float32)
    o2 = discriminator_forward(x2, weight, bias)
    jax.block_until_ready(o2)
    assert jnp.allclose(o2, reference(x2), atol=1e-5, rtol=1e-5)

    # Case 3: multi L-tile path with a masked ragged edge (small cap only to
    # exercise the tiling logic at test shapes).
    x3 = jax.random.normal(kx3, (2, C_IN, 600), dtype=jnp.float32)
    o3 = discriminator_forward(x3, weight, bias, tile_l_max=256)
    jax.block_until_ready(o3)
    assert jnp.allclose(o3, reference(x3), atol=1e-5, rtol=1e-5)

    print("KERNEL_OK")
</pallas_src>

<mosaic_0001>
module attributes {stable_mosaic.version = 11 : i64} {
  func.func @_kernel_2d(%arg0: i32, %arg1: i32, %arg2: memref<13x13xf32, #tpu.memory_space<vmem>>, %arg3: memref<13x1xf32, #tpu.memory_space<vmem>>, %arg4: memref<1x13x16xf32, #tpu.memory_space<vmem>>, %arg5: memref<1x13x16xf32, #tpu.memory_space<vmem>>) attributes {dimension_semantics = [#tpu.dimension_semantics<parallel>, #tpu.dimension_semantics<parallel>], iteration_bounds = array<i64: 2, 1>, scalar_prefetch = 0 : i64, scratch_operands = 0 : i64, tpu.core_type = #tpu.core_type<tc>, window_params = [{pipeline_mode = #tpu.pipeline_mode<synchronous>, transform_indices = @transform_0, window_bounds = array<i64: 13, 13>}, {pipeline_mode = #tpu.pipeline_mode<synchronous>, transform_indices = @transform_1, window_bounds = array<i64: 13, 1>}, {transform_indices = @transform_2, window_bounds = array<i64: 1, 13, 16>}, {transform_indices = @transform_3, window_bounds = array<i64: 1, 13, 16>}]} {
    %c0 = arith.constant 0 : index
    %c0_0 = arith.constant 0 : index
    %0 = vector.load %arg2[%c0, %c0_0] : memref<13x13xf32, #tpu.memory_space<vmem>>, vector<13x13xf32>
    %c0_1 = arith.constant 0 : index
    %c0_2 = arith.constant 0 : index
    %c0_3 = arith.constant 0 : index
    %1 = vector.load %arg4[%c0_1, %c0_2, %c0_3] : memref<1x13x16xf32, #tpu.memory_space<vmem>>, vector<1x13x16xf32>
    %2 = vector.shape_cast %1 : vector<1x13x16xf32> to vector<13x16xf32>
    %cst = arith.constant dense<0.000000e+00> : vector<13x16xf32>
    %3 = tpu.matmul %0, %2, %cst {dimension_numbers = #tpu.dot_dimension_numbers<[1], [0], [0], [1], [0, 0, 1, 1], [], []>} : vector<13x13xf32>, vector<13x16xf32>, vector<13x16xf32> -> vector<13x16xf32>
    %c0_4 = arith.constant 0 : index
    %c0_5 = arith.constant 0 : index
    %4 = vector.load %arg3[%c0_4, %c0_5] : memref<13x1xf32, #tpu.memory_space<vmem>>, vector<13x1xf32>
    %5 = vector.broadcast %4 : vector<13x1xf32> to vector<13x16xf32>
    %6 = arith.addf %3, %5 : vector<13x16xf32>
    %7 = arith.negf %6 : vector<13x16xf32>
    %8 = math.exp %7 : vector<13x16xf32>
    %cst_6 = arith.constant 1.000000e+00 : f32
    %9 = vector.broadcast %cst_6 : f32 to vector<13x16xf32>
    %10 = arith.addf %9, %8 : vector<13x16xf32>
    %11 = arith.divf %9, %10 : vector<13x16xf32>
    %c0_7 = arith.constant 0 : index
    %c0_8 = arith.constant 0 : index
    %c0_9 = arith.constant 0 : index
    %12 = vector.load %arg5[%c0_7, %c0_8, %c0_9] : memref<1x13x16xf32, #tpu.memory_space<vmem>>, vector<1x13x16xf32>
    %13 = vector.shape_cast %12 : vector<1x13x16xf32> to vector<13x16xf32>
    %14 = vector.shape_cast %11 : vector<13x16xf32> to vector<1x13x16xf32>
    tpu.vector_store %arg5[%c0_7, %c0_8, %c0_9], %14 {strides = array<i32>} : memref<1x13x16xf32, #tpu.memory_space<vmem>>, vector<1x13x16xf32>,
    return
  }
  func.func @transform_0(%arg0: i32, %arg1: i32) -> (i32, i32) {
    %c0_i32 = arith.constant 0 : i32
    %c0_i32_0 = arith.constant 0 : i32
    %c0_i32_1 = arith.constant 0 : i32
    return %c0_i32, %c0_i32_0 : i32, i32
  }
  func.func @transform_1(%arg0: i32, %arg1: i32) -> (i32, i32) {
    %c0_i32 = arith.constant 0 : i32
    %c0_i32_0 = arith.constant 0 : i32
    %c0_i32_1 = arith.constant 0 : i32
    return %c0_i32, %c0_i32_0 : i32, i32
  }
  func.func @transform_2(%arg0: i32, %arg1: i32) -> (i32, i32, i32) {
    %c0_i32 = arith.constant 0 : i32
    %c0_i32_0 = arith.constant 0 : i32
    return %arg0, %c0_i32, %arg1 : i32, i32, i32
  }
  func.func @transform_3(%arg0: i32, %arg1: i32) -> (i32, i32, i32) {
    %c0_i32 = arith.constant 0 : i32
    %c0_i32_0 = arith.constant 0 : i32
    return %arg0, %c0_i32, %arg1 : i32, i32, i32
  }
}

</mosaic_0001>

<llo_original>
// kernel: tpu_custom_call.1
$region0: #{tpu_custom_call.1}
  #allocation0 [shape = 'u32[]', space=smem, size = 0x4, offset = 0x4, fixed_abs, tag = 'smem constant byte address 0x4 - core index']
  #allocation1 [shape = 'u32[72,128]{1,0:T(1,128)}', space=vmem, size = 0x9000, scoped, tag = 'internal scratch']
  %s0 = inlined_call_operand.vmem [shape: f32[13,13], index: 0, kind: input, shape index: {}]
  %s1 = inlined_call_operand.vmem [shape: f32[13,1], index: 1, kind: input, shape index: {}]
  %s2 = inlined_call_operand.vmem [shape: f32[2,13,16], index: 2, kind: input, shape index: {}]
  %s3 = inlined_call_operand.vmem [shape: f32[2,13,16], index: 3, kind: output, shape index: {}]
  %s4 = sld [smem:[#allocation0]]
  $region45: #{tpu_custom_call.1} parent=0
    _
  %s6 = ssub.s32 1, %s4
  %s7 = scalar_select 0, %s6, %s4
  loop: start=0, step=1, limit=4
  $region2: #{tpu_custom_call.1} parent=0 // loop_pre_header
    _
  $region3: #{tpu_custom_call.1} parent=0 // loop_header
    %s9 = sphi 0, %s13
    %p10 = scmp.ge.s32.totalorder %s9, 4
    %s16 = sphi 0, %s28
    %s17 = sphi 0, %s24
    %s18 = sphi 0, %s16
    %s19 = sphi 0, %s17
    %s20 = sphi 0, %s18
    %s21 = sphi 0, %s19
    %s29 = sphi 0, %s29
    %s31 = sphi 0, %s29
    %s32 = sphi 0, %s31
    %s46 = sphi 0, %s32
    %s50 = sphi 0, %s50
    %s52 = sphi 0, %s50
    %s53 = sphi 0, %s52
    %s67 = sphi 0, %s53
    %s75 = sphi 0, %s77
    %s78 = sphi 0, %s75
    %s79 = sphi 0, %s78
    %s95 = sphi 0, %s79
    %s103 = sphi 0, %s105
    %s106 = sphi 0, %s103
    %s107 = sphi 0, %s106
    %s123 = sphi 0, %s107
  $region4: #{tpu_custom_call.1} parent=0 // loop_header_branch
    %12 = sbr.rel (%p10) target = $region8
  $region5: #{tpu_custom_call.1} parent=0 // loop_body
    %s14 = ssub.s32 %s9, 1
    %s15 = ssub.s32 %s9, 2
    %s22 = sadd.s32 1, %s17
    %p23 = scmp.ge.s32.totalorder %s22, 1
    %s24 = scalar_select %p23, 0, %s22
    %s25 = sadd.s32 1, %s16
    %s26 = scalar_select %p23, %s25, %s16
    %p27 = scmp.ge.s32.totalorder %s26, 2
    %s28 = scalar_select %p27, 0, %s26
    %s30 = sadd.s32 %s29, 1
    %p33 = scmp.eq.s32.totalorder %s9, 1
    %p34 = scmp.ne.s32.totalorder %s29, %s31
    %p35 = scmp.eq.s32.totalorder %s9, 0
    %p36 = por %p34, %p35
    %p37 = scmp.ne.s32.totalorder %s29, %s31
    %p38 = scmp.eq.s32.totalorder %s14, 1
    %p39 = por %p37, %p38
    %p40 = scmp.ne.s32.totalorder %s31, %s32
    %p41 = scmp.eq.s32.totalorder %s14, 0
    %p42 = por %p40, %p41
    %p43 = scmp.ne.s32.totalorder %s31, %s32
    %p44 = scmp.eq.s32.totalorder %s15, 1
    %p45 = por %p43, %p44
    %p47 = scmp.ne.s32.totalorder %s32, %s46
    %p48 = scmp.eq.s32.totalorder %s15, 0
    %p49 = por %p47, %p48
    %s51 = sadd.s32 %s50, 1
    %p54 = scmp.eq.s32.totalorder %s9, 1
    %p55 = scmp.ne.s32.totalorder %s50, %s52
    %p56 = scmp.eq.s32.totalorder %s9, 0
    %p57 = por %p55, %p56
    %p58 = scmp.ne.s32.totalorder %s50, %s52
    %p59 = scmp.eq.s32.totalorder %s14, 1
    %p60 = por %p58, %p59
    %p61 = scmp.ne.s32.totalorder %s52, %s53
    %p62 = scmp.eq.s32.totalorder %s14, 0
    %p63 = por %p61, %p62
    %p64 = scmp.ne.s32.totalorder %s52, %s53
    %p65 = scmp.eq.s32.totalorder %s15, 1
    %p66 = por %p64, %p65
    %p68 = scmp.ne.s32.totalorder %s53, %s67
    %p69 = scmp.eq.s32.totalorder %s15, 0
    %p70 = por %p68, %p69
    %s71 = ssub.s32 %s16, %s28
    %s72 = ssub.s32 %s17, %s24
    %s73 = sor.u32 %s71, %s72
    %p74 = scmp.eq.s32.totalorder %s73, 0
    %s76 = sadd.s32 %s75, 1
    %s77 = scalar_select %p74, %s75, %s76
    %p80 = pneg %p74
    %p81 = scmp.eq.s32.totalorder %s9, 1
    %p82 = por %p80, %p81
    %p83 = scmp.ne.s32.totalorder %s75, %s78
    %p84 = scmp.eq.s32.totalorder %s9, 0
    %p85 = por %p83, %p84
    %p86 = scmp.ne.s32.totalorder %s75, %s78
    %p87 = scmp.eq.s32.totalorder %s14, 1
    %p88 = por %p86, %p87
    %p89 = scmp.ne.s32.totalorder %s78, %s79
    %p90 = scmp.eq.s32.totalorder %s14, 0
    %p91 = por %p89, %p90
    %p92 = scmp.ne.s32.totalorder %s78, %s79
    %p93 = scmp.eq.s32.totalorder %s15, 1
    %p94 = por %p92, %p93
    %p96 = scmp.ne.s32.totalorder %s79, %s95
    %p97 = scmp.eq.s32.totalorder %s15, 0
    %p98 = por %p96, %p97
    %s99 = ssub.s32 %s16, %s28
    %s100 = ssub.s32 %s17, %s24
    %s101 = sor.u32 %s99, %s100
    %p102 = scmp.eq.s32.totalorder %s101, 0
    %s104 = sadd.s32 %s103, 1
    %s105 = scalar_select %p102, %s103, %s104
    %p108 = pneg %p102
    %p109 = scmp.eq.s32.totalorder %s9, 1
    %p110 = por %p108, %p109
    %p111 = scmp.ne.s32.totalorder %s103, %s106
    %p112 = scmp.eq.s32.totalorder %s9, 0
    %p113 = por %p111, %p112
    %p114 = scmp.ne.s32.totalorder %s103, %s106
    %p115 = scmp.eq.s32.totalorder %s14, 1
    %p116 = por %p114, %p115
    %p117 = scmp.ne.s32.totalorder %s106, %s107
    %p118 = scmp.eq.s32.totalorder %s14, 0
    %p119 = por %p117, %p118
    %p120 = scmp.ne.s32.totalorder %s106, %s107
    %p121 = scmp.eq.s32.totalorder %s15, 1
    %p122 = por %p120, %p121
    %p124 = scmp.ne.s32.totalorder %s107, %s123
    %p125 = scmp.eq.s32.totalorder %s15, 0
    %p126 = por %p124, %p125
    %p127 = scmp.le.s32.totalorder 1, %s9
    %p128 = scmp.lt.s32.totalorder %s9, 3
    %p129 = pnand %p127, %p128
    %p130 = pneg %p129
    // Predicated region
    $region9: #{tpu_custom_call.1} parent=5 // pred_check
      _
    $region10: #{tpu_custom_call.1} parent=5 // pred_check_branch
      %132 = sbr.rel (%p129) target = $region12
    $region11: #{tpu_custom_call.1} parent=5 // pred_region
      %s133 = ssub.s32 %s9, 1
      // Predicated region
      $region13: #{tpu_custom_call.1} parent=11 // pred_check
        %p134 = pneg %p42
      $region14: #{tpu_custom_call.1} parent=11 // pred_check_branch
        %136 = sbr.rel (%p134) target = $region16
      $region15: #{tpu_custom_call.1} parent=11 // pred_region
        _
      $region16: #{tpu_custom_call.1} parent=11 // pred_fallthru
        _
      // Predicated region
      $region17: #{tpu_custom_call.1} parent=11 // pred_check
        %p137 = pneg %p63
      $region18: #{tpu_custom_call.1} parent=11 // pred_check_branch
        %139 = sbr.rel (%p137) target = $region20
      $region19: #{tpu_custom_call.1} parent=11 // pred_region
        _
      $region20: #{tpu_custom_call.1} parent=11 // pred_fallthru
        _
    $region12: #{tpu_custom_call.1} parent=5 // pred_fallthru
      _
    %p140 = scmp.lt.s32.totalorder %s9, 2
    // Predicated region
    $region21: #{tpu_custom_call.1} parent=5 // pred_check
      %p141 = pneg %p140
    $region22: #{tpu_custom_call.1} parent=5 // pred_check_branch
      %143 = sbr.rel (%p141) target = $region24
    $region23: #{tpu_custom_call.1} parent=5 // pred_region
      // Predicated region
      $region25: #{tpu_custom_call.1} parent=23 // pred_check
        %p144 = pneg %p85
      $region26: #{tpu_custom_call.1} parent=23 // pred_check_branch
        %146 = sbr.rel (%p144) target = $region28
      $region27: #{tpu_custom_call.1} parent=23 // pred_region
        %p147 = scmp.lt.s32.totalorder %s16, 1
        %s148 = scalar_select %p147, %s16, 1
        %p149 = scmp.lt.s32.totalorder %s17, 0
        %s150 = scalar_select %p149, %s17, 0
        %s151 = smul.addr %s148, 2
        %s152 = sadd.s32 %s150, %s151
        %s153 = smul.addr %s152, 8
        %s154 = scalar_lea.vmem %s2, %s153
      $region28: #{tpu_custom_call.1} parent=23 // pred_fallthru
        _
    $region24: #{tpu_custom_call.1} parent=5 // pred_fallthru
      _
    %p155 = scmp.le.s32.totalorder 1, %s9
    %p156 = scmp.lt.s32.totalorder %s9, 3
    %p157 = pnand %p155, %p156
    %p158 = pneg %p157
    // Predicated region
    $region29: #{tpu_custom_call.1} parent=5 // pred_check
      _
    $region30: #{tpu_custom_call.1} parent=5 // pred_check_branch
      %160 = sbr.rel (%p157) target = $region32
    $region31: #{tpu_custom_call.1} parent=5 // pred_region
      %s161 = ssub.s32 %s9, 1
      %p162 = pneg %p42
      %p163 = pneg %p39
      %p164 = pneg %p63
      %p165 = pneg %p60
      %p166 = scmp.lt.s32.totalorder %s18, 1
      %s167 = scalar_select %p166, %s18, 1
      %p168 = scmp.lt.s32.totalorder %s19, 0
      %s169 = scalar_select %p168, %s19, 0
      %s170 = smul.addr %s167, 2
      %s171 = sadd.s32 %s169, %s170
      %s172 = smul.addr %s171, 8
      %s173 = scalar_lea.vmem %s2, %s172
      %p174 = pneg %p91
      %p175 = pneg %p88
      %p176 = pneg %p119
      %p177 = pneg %p116
      %p178 = scmp.lt.s32.totalorder %s18, 1
      %s179 = scalar_select %p178, %s18, 1
      %p180 = scmp.lt.s32.totalorder %s19, 0
      %s181 = scalar_select %p180, %s19, 0
      %s182 = smul.addr %s179, 2
      %s183 = sadd.s32 %s181, %s182
      %s184 = smul.addr %s183, 8
      %s185 = scalar_lea.vmem %s3, %s184
      %p186 = scmp.lt.s32.totalorder %s18, 1
      %s187 = scalar_select %p186, %s18, 1
      %p188 = scmp.lt.s32.totalorder %s19, 0
      %s189 = scalar_select %p188, %s19, 0
      %s190 = smul.addr %s187, 2
      %s191 = sadd.s32 %s189, %s190
      %s192 = smul.addr %s191, 8
      %s193 = scalar_lea.vmem %s2, %s192
      %p194 = scmp.lt.s32.totalorder %s18, 1
      %s195 = scalar_select %p194, %s18, 1
      %p196 = scmp.lt.s32.totalorder %s19, 0
      %s197 = scalar_select %p196, %s19, 0
      %s198 = smul.addr %s195, 2
      %s199 = sadd.s32 %s197, %s198
      %s200 = smul.addr %s199, 8
      %s201 = scalar_lea.vmem %s3, %s200
      %v202 = vld [vmem:[%s0] sm:$0xff]
      %v203 = vld [vmem:[%s0 + $0x8] sm:$0x1f]
      %v204 = vld [vmem:[%s193] sm:$0xff]
      %v205 = vld [vmem:[%s193 + $0x8] sm:$0x1f]
      %v206 = vld [vmem:[%s1] sm:$0xff]
      %v207 = vld [vmem:[%s1 + $0x8] sm:$0x1f]
      %209 = vset.pattern.permute.xlu0 0
      %210 = vperm.xlu0 %209, %v206
      %v211 = vpop.permute.xlu0 %210
      %214 = vset.pattern.permute.xlu0 0
      %215 = vperm.xlu0 %214, %v207
      %v216 = vpop.permute.xlu0 %215
      %vm218 = vcmask 105472
      %v220 = vsel %vm218, %v202, 0
      %v223 = vsel %vm218, %v203, 0
      %vm225 = vcmask 1044480
      %v227 = vsel %vm225, %v205, 0
      %229 = vmatpush.msra.mxu0 0.0
      %230 = vmatpush.msra.mxu0 0.0
      %231 = vmatpush.msra.mxu0 0.0
      %232 = vmatpush.msra.mxu0 0.0
      %233 = vmatpush.msra.mxu0 0.0
      %234 = vmatpush.msra.mxu0 0.0
      %235 = vmatpush.msra.mxu0 0.0
      %236 = vmatpush.msra.mxu0 0.0
      %237 = vmatpush.msra.mxu0 0.0
      %238 = vmatpush.msra.mxu0 0.0
      %239 = vmatpush.msra.mxu0 0.0
      %240 = vmatpush.msra.mxu0 0.0
      %241 = vmatpush.msra.mxu0 0.0
      %242 = vmatpush.msra.mxu0 0.0
      %243 = vmatpush.msra.mxu0 %v227
      %244 = vmatpush.msra.mxu0 %v204
      %245 = vmatmul.f32.gmra.mxu0 %v220
      %v246 = vpop.f32.mrf.mxu0
      %v247 = vadd.f32 %v211, %v246
      %248 = vmatmul.f32.gmra.mxu0 %v223
      %v249 = vpop.f32.mrf.mxu0
      %v250 = vadd.f32 %v216, %v249
      %251 = vdwg.mxu0
      %v252 = vxor.u32 %v247, 2147483648
      %v253 = vxor.u32 %v250, 2147483648
      %v254 = vmul.f32 %v252, 1.442695
      %v255 = vpow.pop %v254
      %v256 = vmul.f32 %v253, 1.442695
      %v257 = vpow.pop %v256
      %v258 = vadd.f32 %v255, 1.0
      %v259 = vadd.f32 %v257, 1.0
      %v260 = vrcp.pop %v258
      %v261 = vmul.f32 %v258, %v260
      %v262 = vsub.f32 1.0, %v261
      %v263 = vmul.f32 %v260, %v262
      %v264 = vadd.f32 %v260, %v263
      %vm265 = vweird.f32 %v258
      %vm266 = vweird.f32 %v260
      %vm267 = vmor %vm265, %vm266
      %v268 = vsel %vm267, %v260, %v264
      %v269 = vand.u32 2147483647, %v258
      %vm270 = vcmp.eq.f32.partialorder %v269, 8.507059e+37
      %v271 = vand.u32 %v258, 2147483648
      %v272 = vor.u32 1.1754944e-38, %v271
      %v273 = vsel %vm270, %v272, %v268
      %v274 = vmul.f32 1.0, %v273
      %v275 = vrcp.pop %v259
      %v276 = vmul.f32 %v259, %v275
      %v277 = vsub.f32 1.0, %v276
      %v278 = vmul.f32 %v275, %v277
      %v279 = vadd.f32 %v275, %v278
      %vm280 = vweird.f32 %v259
      %vm281 = vweird.f32 %v275
      %vm282 = vmor %vm280, %vm281
      %v283 = vsel %vm282, %v275, %v279
      %v284 = vand.u32 2147483647, %v259
      %vm285 = vcmp.eq.f32.partialorder %v284, 8.507059e+37
      %v286 = vand.u32 %v259, 2147483648
      %v287 = vor.u32 1.1754944e-38, %v286
      %v288 = vsel %vm285, %v287, %v283
      %v289 = vmul.f32 1.0, %v288
      %vm290 = vcmask 130048
      %291 = vst.msk [vmem:[%s201] sm:$0xff] %vm290, %v274
      %vm292 = vcmask 126976
      %293 = vst.msk [vmem:[%s201 + $0x8] sm:$0x1f] %vm292, %v289
      %p294 = scmp.lt.s32.totalorder %s18, 1
      %s295 = scalar_select %p294, %s18, 1
      %p296 = scmp.lt.s32.totalorder %s19, 0
      %s297 = scalar_select %p296, %s19, 0
      %s298 = smul.addr %s295, 2
      %s299 = sadd.s32 %s297, %s298
      %s300 = smul.addr %s299, 8
      %s301 = scalar_lea.vmem %s3, %s300
      // Predicated region
      $region33: #{tpu_custom_call.1} parent=31 // pred_check
        %p302 = pneg %p116
      $region34: #{tpu_custom_call.1} parent=31 // pred_check_branch
        %304 = sbr.rel (%p302) target = $region36
      $region35: #{tpu_custom_call.1} parent=31 // pred_region
        _
      $region36: #{tpu_custom_call.1} parent=31 // pred_fallthru
        _
    $region32: #{tpu_custom_call.1} parent=5 // pred_fallthru
      _
    %p305 = scmp.le.s32.totalorder 2, %s9
    // Predicated region
    $region37: #{tpu_custom_call.1} parent=5 // pred_check
      %p306 = pneg %p305
    $region38: #{tpu_custom_call.1} parent=5 // pred_check_branch
      %308 = sbr.rel (%p306) target = $region40
    $region39: #{tpu_custom_call.1} parent=5 // pred_region
      %s309 = ssub.s32 %s9, 2
      // Predicated region
      $region41: #{tpu_custom_call.1} parent=39 // pred_check
        %p310 = pneg %p122
      $region42: #{tpu_custom_call.1} parent=39 // pred_check_branch
        %312 = sbr.rel (%p310) target = $region44
      $region43: #{tpu_custom_call.1} parent=39 // pred_region
        %p313 = scmp.lt.s32.totalorder %s20, 1
        %s314 = scalar_select %p313, %s20, 1
        %p315 = scmp.lt.s32.totalorder %s21, 0
        %s316 = scalar_select %p315, %s21, 0
        %s317 = smul.addr %s314, 2
        %s318 = sadd.s32 %s316, %s317
        %s319 = smul.addr %s318, 8
        %s320 = scalar_lea.vmem %s3, %s319
      $region44: #{tpu_custom_call.1} parent=39 // pred_fallthru
        _
    $region40: #{tpu_custom_call.1} parent=5 // pred_fallthru
      _
  $region6: #{tpu_custom_call.1} parent=0 // loop_footer
    %s13 = sadd.s32 1, %s9
  $region7: #{tpu_custom_call.1} parent=0 // loop_footer_branch
    %8 = sbr.rel target = $region3
  $region8: #{tpu_custom_call.1} parent=0 // loop_exit
    _

</llo_original>
